<compile_context>
chip_gen: v6e
topology: v6e:2x2x1
jax: 0.10.0
libtpu: 0.0.40
codegen_flags: <defaults>
</compile_context>

<pallas_src>
import functools

import jax
import jax.numpy as jnp
from jax.experimental import pallas as pl
from jax.experimental.pallas import tpu as pltpu

ALPHA = 0.25
GAMMA = 2.0  # exploited below as an explicit square


def _focal_loss_kernel(n_ref, x_ref, t_ref, w_ref, o_ref, *, alpha, unit_weight):
    i = pl.program_id(0)
    i_last = pl.num_programs(0) - 1

    x = x_ref[...].astype(jnp.float32)        # [C, TN] logits (samples on lanes)
    t = t_ref[...]                            # [1, TN] int32 targets
    c, tn = x.shape

    # Numerically stable logsumexp over the class (sublane) axis.
    m = jnp.max(x, axis=0, keepdims=True)                 # [1, TN]
    e = jnp.exp(x - m)                                    # [C, TN]
    sum_e = jnp.sum(e, axis=0, keepdims=True)             # [1, TN]
    lse_m = jnp.log(sum_e)                                # lse - m

    # One-hot of the target class along sublanes.
    cls = jax.lax.broadcasted_iota(jnp.int32, (c, tn), 0)
    onehot = cls == t                                     # [C, TN]

    if unit_weight:
        # ce = lse - x[t]
        xt_m = jnp.sum(jnp.where(onehot, x - m, 0.0), axis=0, keepdims=True)
        ce = lse_m - xt_m
        # pt = exp(-ce) = softmax_t; reuse exp(x - m) -> one fewer EUP exp.
        e_t = jnp.sum(jnp.where(onehot, e, 0.0), axis=0, keepdims=True)
        pt = e_t / sum_e
    else:
        w = w_ref[...].astype(jnp.float32)                # [C, 1]
        # Fused one-hot reduction: ce = w[t] * (lse - x[t]).
        ce = jnp.sum(jnp.where(onehot, w * (lse_m - (x - m)), 0.0),
                     axis=0, keepdims=True)
        pt = jnp.exp(-ce)

    # Focal modulation; gamma == 2 -> explicit square (no pow / log(0) path).
    one_minus_pt = 1.0 - pt
    focal = alpha * one_minus_pt * one_minus_pt * ce      # [1, TN]

    # Full tiles: plain sum, no tail-masking VPU work.
    @pl.when(i != i_last)
    def _():
        o_ref[...] = jnp.broadcast_to(jnp.sum(focal), (1, 8, 128))

    # Last tile: mask the ragged/garbage tail (select -> NaN-safe), then sum.
    @pl.when(i == i_last)
    def _():
        col = i * tn + jax.lax.broadcasted_iota(jnp.int32, (1, tn), 1)
        masked = jnp.where(col < n_ref[0], focal, 0.0)
        o_ref[...] = jnp.broadcast_to(jnp.sum(masked), (1, 8, 128))


def _round_up(x, m):
    return ((x + m - 1) // m) * m


def _vmem_limit_bytes():
    # Generation-aware budget: v7x has 64 MiB per TensorCore, v5e/v6e 128 MiB.
    try:
        phys = getattr(pltpu.get_tpu_info(), "vmem_capacity_bytes", 64 << 20)
    except Exception:
        phys = 64 << 20
    return int(min(phys // 2, 28 << 20))


def weighted_focal_loss(inputs, targets, weight=None, *, alpha=ALPHA, gamma=GAMMA,
                        tile_n=None, class_major=False):
    """Focal loss.

    inputs : [N, C] float logits (or [C, N] if class_major=True; avoids the
             wrapper transpose copy).  bf16 is accepted untouched.
    targets: [N] int class indices.
    weight : [C] per-class weights or None.
    """
    if gamma != 2.0:
        # TODO(synk): general-gamma pow path (exp(gamma*log1p(-pt))) not implemented.
        raise ValueError("kernel specializes gamma == 2.0")

    if class_major:
        c, n = inputs.shape
        x_cm = inputs                                          # [C, N]
    else:
        n, c = inputs.shape
        # TODO(synk): have the producer emit class-major logits to skip this copy.
        x_cm = inputs.T                                        # [C, N]

    unit_weight = weight is None
    if unit_weight:
        weight = jnp.ones((c,), dtype=jnp.float32)

    in_bytes = jnp.dtype(inputs.dtype).itemsize
    vmem_limit = _vmem_limit_bytes()
    if tile_n is None:
        # Double-buffered input blocks + ~6 [C,TN] f32 temps + a few [1,TN]
        # rows; target ~1/2 of the explicit VMEM limit.
        per_col = 2 * (c * in_bytes + 4) + 6 * c * 4 + 4 * 4
        tile_n = (vmem_limit // 2) // per_col
        tile_n = max(128, min(128 * 1024, (tile_n // 128) * 128))
    else:
        tile_n = max(128, _round_up(int(tile_n), 128))
    tile_n = min(tile_n, _round_up(n, 128))

    t2d = targets.astype(jnp.int32).reshape(1, n)
    w2d = weight.astype(jnp.float32).reshape(c, 1)

    # Degenerate tiny-N guard: keep the lane axis at one full 128-lane tile so
    # the single block never exceeds the array.  Large-N path stays copy-free.
    if n < 128:
        pad = 128 - n
        x_cm = jnp.pad(x_cm, ((0, 0), (0, pad)))
        t2d = jnp.pad(t2d, ((0, 0), (0, pad)))

    grid = pl.cdiv(max(n, 128), tile_n)
    n_s = jnp.asarray([n], dtype=jnp.int32)                    # scalar prefetch

    kernel = functools.partial(_focal_loss_kernel, alpha=float(alpha),
                               unit_weight=unit_weight)

    cost = pl.CostEstimate(
        flops=int(12 * c * n),
        transcendentals=int((c + 2) * n),
        bytes_accessed=int(n * (c * in_bytes + 4) + c * 4 + grid * 8 * 128 * 4),
    )

    partials = pl.pallas_call(
        kernel,
        out_shape=jax.ShapeDtypeStruct((grid, 8, 128), jnp.float32),
        grid_spec=pltpu.PrefetchScalarGridSpec(
            num_scalar_prefetch=1,
            grid=(grid,),
            in_specs=[
                pl.BlockSpec((c, tile_n), lambda i, ns: (0, i)),   # logits tile
                pl.BlockSpec((1, tile_n), lambda i, ns: (0, i)),   # targets tile
                pl.BlockSpec((c, 1), lambda i, ns: (0, 0)),        # class weights
            ],
            out_specs=pl.BlockSpec((1, 8, 128), lambda i, ns: (i, 0, 0)),
        ),
        compiler_params=pltpu.CompilerParams(
            dimension_semantics=("parallel",),   # per-tile partials -> megacore ok
            vmem_limit_bytes=vmem_limit,
        ),
        cost_estimate=cost,
    )(n_s, x_cm, t2d, w2d)

    # Finalize: sum the per-tile partials, mean over the global sample count.
    return jnp.sum(partials[:, 0, 0]) / jnp.float32(n)


def _reference(inputs, targets, weight, alpha=ALPHA, gamma=GAMMA):
    # Pure-JAX reference for correctness checking.
    logp = jax.nn.log_softmax(inputs.astype(jnp.float32), axis=-1)
    w_t = weight[targets]
    ce = -w_t * jnp.take_along_axis(logp, targets[:, None], axis=-1)[:, 0]
    pt = jnp.exp(-ce)
    return jnp.mean(alpha * (1.0 - pt) ** gamma * ce)


if __name__ == "__main__":
    key = jax.random.PRNGKey(0)
    k1, k2, k3, k4, k5, k6, k7 = jax.random.split(key, 7)

    # Case 1: small shapes implied by the module (batch=8, classes=4), weighted.
    N1, C1 = 8, 4
    x1 = jax.random.normal(k1, (N1, C1), dtype=jnp.float32)
    t1 = jax.random.randint(k2, (N1,), 0, C1, dtype=jnp.int32)
    w1 = 0.5 + jax.random.uniform(k3, (C1,), dtype=jnp.float32)
    loss1 = weighted_focal_loss(x1, t1, w1)
    jax.block_until_ready(loss1)
    ref1 = _reference(x1, t1, w1)
    assert jnp.allclose(loss1, ref1, atol=1e-5, rtol=1e-4), (loss1, ref1)

    # Case 2: multi-tile grid with a ragged tail (exercises per-tile partials,
    # tail masking, and the unit-weight EUP fast path).
    N2, C2 = 300, 5
    x2 = jax.random.normal(k4, (N2, C2), dtype=jnp.float32)
    t2 = jax.random.randint(k5, (N2,), 0, C2, dtype=jnp.int32)
    loss2 = weighted_focal_loss(x2, t2, None, tile_n=128)
    jax.block_until_ready(loss2)
    ref2 = _reference(x2, t2, jnp.ones((C2,), jnp.float32))
    assert jnp.allclose(loss2, ref2, atol=1e-5, rtol=1e-4), (loss2, ref2)

    # Case 3: bf16 logits passed through untouched (upcast inside the kernel).
    N3, C3 = 200, 4
    x3 = jax.random.normal(k6, (N3, C3), dtype=jnp.float32).astype(jnp.bfloat16)
    t3 = jax.random.randint(k7, (N3,), 0, C3, dtype=jnp.int32)
    w3 = jnp.array([1.0, 2.0, 0.5, 1.5], dtype=jnp.float32)
    loss3 = weighted_focal_loss(x3, t3, w3, tile_n=128)
    jax.block_until_ready(loss3)
    ref3 = _reference(x3, t3, w3)
    assert jnp.allclose(loss3, ref3, atol=1e-4, rtol=1e-3), (loss3, ref3)

    print("KERNEL_OK")
</pallas_src>

<mosaic_0001>
module attributes {stable_mosaic.version = 11 : i64} {
  func.func @_focal_loss_kernel(%arg0: i32, %arg1: memref<1xi32, #tpu.memory_space<smem>>, %arg2: memref<4x128xf32, #tpu.memory_space<vmem>>, %arg3: memref<1x128xi32, #tpu.memory_space<vmem>>, %arg4: memref<4x1xf32, #tpu.memory_space<vmem>>, %arg5: memref<1x8x128xf32, #tpu.memory_space<vmem>>) attributes {dimension_semantics = [#tpu.dimension_semantics<parallel>], iteration_bounds = array<i64: 1>, scalar_prefetch = 1 : i64, scratch_operands = 0 : i64, tpu.core_type = #tpu.core_type<tc>, window_params = [{transform_indices = @transform_0, window_bounds = array<i64: 4, 128>}, {transform_indices = @transform_1, window_bounds = array<i64: 1, 128>}, {pipeline_mode = #tpu.pipeline_mode<synchronous>, transform_indices = @transform_2, window_bounds = array<i64: 4, 1>}, {transform_indices = @transform_3, window_bounds = array<i64: 1, 8, 128>}]} {
    %c0 = arith.constant 0 : index
    %c0_0 = arith.constant 0 : index
    %0 = vector.load %arg2[%c0, %c0_0] : memref<4x128xf32, #tpu.memory_space<vmem>>, vector<4x128xf32>
    %c0_1 = arith.constant 0 : index
    %c0_2 = arith.constant 0 : index
    %1 = vector.load %arg3[%c0_1, %c0_2] : memref<1x128xi32, #tpu.memory_space<vmem>>, vector<1x128xi32>
    %cst = arith.constant dense<0xFF800000> : vector<128xf32>
    %2 = vector.multi_reduction <maximumf>, %0, %cst [0] : vector<4x128xf32> to vector<128xf32>
    %3 = vector.shape_cast %2 : vector<128xf32> to vector<1x128xf32>
    %4 = vector.broadcast %3 : vector<1x128xf32> to vector<4x128xf32>
    %5 = arith.subf %0, %4 : vector<4x128xf32>
    %6 = math.exp %5 : vector<4x128xf32>
    %cst_3 = arith.constant dense<0.000000e+00> : vector<128xf32>
    %7 = vector.multi_reduction <add>, %6, %cst_3 [0] : vector<4x128xf32> to vector<128xf32>
    %8 = vector.shape_cast %7 : vector<128xf32> to vector<1x128xf32>
    %9 = math.log %8 : vector<1x128xf32>
    %10 = tpu.iota {dimensions = array<i32: 0>} : vector<4x128xi32>
    %11 = vector.broadcast %1 : vector<1x128xi32> to vector<4x128xi32>
    %12 = arith.cmpi eq, %10, %11 : vector<4x128xi32>
    %c0_4 = arith.constant 0 : index
    %c0_5 = arith.constant 0 : index
    %13 = vector.load %arg4[%c0_4, %c0_5] : memref<4x1xf32, #tpu.memory_space<vmem>>, vector<4x1xf32>
    %14 = vector.broadcast %3 : vector<1x128xf32> to vector<4x128xf32>
    %15 = arith.subf %0, %14 : vector<4x128xf32>
    %16 = vector.broadcast %9 : vector<1x128xf32> to vector<4x128xf32>
    %17 = arith.subf %16, %15 : vector<4x128xf32>
    %18 = vector.broadcast %13 : vector<4x1xf32> to vector<4x128xf32>
    %19 = arith.mulf %18, %17 : vector<4x128xf32>
    %cst_6 = arith.constant 0.000000e+00 : f32
    %20 = vector.broadcast %cst_6 : f32 to vector<4x128xf32>
    %21 = arith.select %12, %19, %20 : vector<4x128xi1>, vector<4x128xf32>
    %cst_7 = arith.constant dense<0.000000e+00> : vector<128xf32>
    %22 = vector.multi_reduction <add>, %21, %cst_7 [0] : vector<4x128xf32> to vector<128xf32>
    %23 = vector.shape_cast %22 : vector<128xf32> to vector<1x128xf32>
    %cst_8 = arith.constant 0.000000e+00 : f32
    %24 = vector.broadcast %cst_8 : f32 to vector<1x128xf32>
    %25 = arith.subf %24, %23 : vector<1x128xf32>
    %26 = math.exp %25 : vector<1x128xf32>
    %cst_9 = arith.constant 1.000000e+00 : f32
    %27 = vector.broadcast %cst_9 : f32 to vector<1x128xf32>
    %28 = arith.subf %27, %26 : vector<1x128xf32>
    %cst_10 = arith.constant 2.500000e-01 : f32
    %29 = vector.broadcast %cst_10 : f32 to vector<1x128xf32>
    %30 = arith.mulf %29, %28 : vector<1x128xf32>
    %31 = arith.mulf %30, %28 : vector<1x128xf32>
    %32 = arith.mulf %31, %23 : vector<1x128xf32>
    %c0_i32 = arith.constant 0 : i32
    %33 = arith.cmpi ne, %arg0, %c0_i32 : i32
    %34 = arith.extui %33 : i1 to i32
    %c0_i32_11 = arith.constant 0 : i32
    %35 = arith.cmpi ne, %34, %c0_i32_11 : i32
    scf.if %35 {
      %39 = vector.shape_cast %32 : vector<1x128xf32> to vector<1x1x128xf32>
      %cst_14 = arith.constant dense<0.000000e+00> : vector<1xf32>
      %40 = vector.multi_reduction <add>, %39, %cst_14 [1, 2] : vector<1x1x128xf32> to vector<1xf32>
      %41 = vector.shape_cast %40 : vector<1xf32> to vector<1x1x1xf32>
      %42 = vector.extract %41[0, 0, 0] : f32 from vector<1x1x1xf32>
      %43 = vector.broadcast %42 : f32 to vector<1x8x128xf32>
      %c0_15 = arith.constant 0 : index
      %c0_16 = arith.constant 0 : index
      %c0_17 = arith.constant 0 : index
      %44 = vector.load %arg5[%c0_15, %c0_16, %c0_17] : memref<1x8x128xf32, #tpu.memory_space<vmem>>, vector<1x8x128xf32>
      tpu.vector_store %arg5[%c0_15, %c0_16, %c0_17], %43 {strides = array<i32>} : memref<1x8x128xf32, #tpu.memory_space<vmem>>, vector<1x8x128xf32>,
    } else {
    }
    %c0_i32_12 = arith.constant 0 : i32
    %36 = arith.cmpi eq, %arg0, %c0_i32_12 : i32
    %37 = arith.extui %36 : i1 to i32
    %c0_i32_13 = arith.constant 0 : i32
    %38 = arith.cmpi ne, %37, %c0_i32_13 : i32
    scf.if %38 {
      %c128_i32 = arith.constant 128 : i32
      %39 = arith.muli %arg0, %c128_i32 : i32
      %40 = tpu.iota {dimensions = array<i32: 1>} : vector<1x128xi32>
      %41 = vector.broadcast %39 : i32 to vector<1x128xi32>
      %42 = arith.addi %41, %40 : vector<1x128xi32>
      %c0_14 = arith.constant 0 : index
      %43 = memref.load %arg1[%c0_14] : memref<1xi32, #tpu.memory_space<smem>>
      %44 = vector.broadcast %43 : i32 to vector<1x128xi32>
      %45 = arith.cmpi slt, %42, %44 : vector<1x128xi32>
      %cst_15 = arith.constant 0.000000e+00 : f32
      %46 = vector.broadcast %cst_15 : f32 to vector<1x128xf32>
      %47 = arith.select %45, %32, %46 : vector<1x128xi1>, vector<1x128xf32>
      %48 = vector.shape_cast %47 : vector<1x128xf32> to vector<1x1x128xf32>
      %cst_16 = arith.constant dense<0.000000e+00> : vector<1xf32>
      %49 = vector.multi_reduction <add>, %48, %cst_16 [1, 2] : vector<1x1x128xf32> to vector<1xf32>
      %50 = vector.shape_cast %49 : vector<1xf32> to vector<1x1x1xf32>
      %51 = vector.extract %50[0, 0, 0] : f32 from vector<1x1x1xf32>
      %52 = vector.broadcast %51 : f32 to vector<1x8x128xf32>
      %c0_17 = arith.constant 0 : index
      %c0_18 = arith.constant 0 : index
      %c0_19 = arith.constant 0 : index
      %53 = vector.load %arg5[%c0_17, %c0_18, %c0_19] : memref<1x8x128xf32, #tpu.memory_space<vmem>>, vector<1x8x128xf32>
      tpu.vector_store %arg5[%c0_17, %c0_18, %c0_19], %52 {strides = array<i32>} : memref<1x8x128xf32, #tpu.memory_space<vmem>>, vector<1x8x128xf32>,
    } else {
    }
    return
  }
  func.func @transform_0(%arg0: i32, %arg1: memref<1xi32, #tpu.memory_space<smem>>) -> (i32, i32) {
    %c0_i32 = arith.constant 0 : i32
    %c0_i32_0 = arith.constant 0 : i32
    return %c0_i32, %arg0 : i32, i32
  }
  func.func @transform_1(%arg0: i32, %arg1: memref<1xi32, #tpu.memory_space<smem>>) -> (i32, i32) {
    %c0_i32 = arith.constant 0 : i32
    %c0_i32_0 = arith.constant 0 : i32
    return %c0_i32, %arg0 : i32, i32
  }
  func.func @transform_2(%arg0: i32, %arg1: memref<1xi32, #tpu.memory_space<smem>>) -> (i32, i32) {
    %c0_i32 = arith.constant 0 : i32
    %c0_i32_0 = arith.constant 0 : i32
    %c0_i32_1 = arith.constant 0 : i32
    return %c0_i32, %c0_i32_0 : i32, i32
  }
  func.func @transform_3(%arg0: i32, %arg1: memref<1xi32, #tpu.memory_space<smem>>) -> (i32, i32, i32) {
    %c0_i32 = arith.constant 0 : i32
    %c0_i32_0 = arith.constant 0 : i32
    %c0_i32_1 = arith.constant 0 : i32
    return %arg0, %c0_i32, %c0_i32_0 : i32, i32, i32
  }
}

</mosaic_0001>

<llo_original>
// kernel: tpu_custom_call.1
$region0: #{tpu_custom_call.1}
  #allocation0 [shape = 'u32[]', space=smem, size = 0x4, offset = 0x4, fixed_abs, tag = 'smem constant byte address 0x4 - core index']
  #allocation1 [shape = 'u32[144,128]{1,0:T(1,128)}', space=vmem, size = 0x12000, scoped, tag = 'internal scratch']
  #allocation2 [shape = 's32[1]{0}', space=sflag, size = 0x4, scoped, tag = 'scoped memory for tpu_custom_call.1']
  #allocation3 [shape = 's32[1]{0:T(128)S(6)}', space=smem, size = 0x200, scoped, tag = 'prefetched SMEM operand 0']
  %s0 = inlined_call_operand.<no memory space> [shape: s32[1], index: 0, kind: input, shape index: {}]
  %s1 = inlined_call_operand.vmem [shape: f32[4,128], index: 1, kind: input, shape index: {}]
  %s2 = inlined_call_operand.vmem [shape: s32[1,128], index: 2, kind: input, shape index: {}]
  %s3 = inlined_call_operand.vmem [shape: f32[4,1], index: 3, kind: input, shape index: {}]
  %s4 = inlined_call_operand.hbm [shape: f32[1,8,128], index: 4, kind: output, shape index: {}]
  %s5 = sld [smem:[#allocation0]]
  $region30: #{tpu_custom_call.1} parent=0
    _
  %s7 = ssub.s32 1, %s5
  %s8 = scalar_select 0, %s7, %s5
  %9 = sst [smem:[#allocation3]] %s0
  $region1: #{tpu_custom_call.1} parent=0
    #allocation4 [shape = 'u8[4096]{0}', space=vmem, size = 0x1000, scoped, tag = 'output window, operand 0, single buffered']
    #allocation5 [shape = 's32[1]{0}', space=sflag, size = 0x4, scoped, tag = 'scoped memory for tpu_custom_call.1']
    %10 = vsyncpa [#allocation5], 0
    // Predicated region
    $region2: #{tpu_custom_call.1} parent=1 // pred_check
      _
    $region3: #{tpu_custom_call.1} parent=1 // pred_check_branch
      %12 = sbr.rel (0) target = $region5
    $region4: #{tpu_custom_call.1} parent=1 // pred_region
      _
    $region5: #{tpu_custom_call.1} parent=1 // pred_fallthru
      _
    // Predicated region
    $region6: #{tpu_custom_call.1} parent=1 // pred_check
      _
    $region7: #{tpu_custom_call.1} parent=1 // pred_check_branch
      %14 = sbr.rel (0) target = $region9
    $region8: #{tpu_custom_call.1} parent=1 // pred_region
      _
    $region9: #{tpu_custom_call.1} parent=1 // pred_fallthru
      _
    // Predicated region
    $region10: #{tpu_custom_call.1} parent=1 // pred_check
      _
    $region11: #{tpu_custom_call.1} parent=1 // pred_check_branch
      %16 = sbr.rel (0) target = $region13
    $region12: #{tpu_custom_call.1} parent=1 // pred_region
      _
    $region13: #{tpu_custom_call.1} parent=1 // pred_fallthru
      _
    %v17 = vld [vmem:[%s1] sm:$0xf]
    %v18 = vld [vmem:[%s2] sm:$0x1]
    %vm19 = vcmask 1043456
    %v20 = vsel %vm19, %v17, -inf
    %v21 = vrot.slane %v20, 4
    %v22 = vmax.f32 %v20, %v21
    %v23 = vrot.slane %v22, 2
    %v24 = vmax.f32 %v22, %v23
    %v25 = vrot.slane %v24, 1
    %v26 = vmax.f32 %v24, %v25
    %v27 = vsub.f32 %v17, %v26
    %v28 = vmul.f32 %v27, 1.442695
    %v29 = vpow.pop %v28
    %v30 = vsel %vm19, %v29, 0.0
    %v31 = vrot.slane %v30, 4
    %v32 = vadd.f32 %v30, %v31
    %v33 = vrot.slane %v32, 2
    %v34 = vadd.f32 %v32, %v33
    %v35 = vrot.slane %v34, 1
    %v36 = vadd.f32 %v34, %v35
    %v37 = vlog2.pop %v36
    %v38 = vmul.f32 %v37, 0.6931472
    %v39 = vlaneseq
    %v40 = vshrl.u32 %v39, 7
    %v41 = vlaneseq
    %v42 = vshrl.u32 %v41, 7
    %v43 = vsub.s32 0, %v42
    %v44 = vrot.slane %v18, %v43
    %vm45 = vcmp.eq.s32.totalorder %v40, %v44
    %v46 = vld [vmem:[%s3] sm:$0xf]
    %v47 = vsub.f32 %v38, %v27
    %49 = vset.pattern.permute.xlu0 0
    %50 = vperm.xlu0 %49, %v46
    %v51 = vpop.permute.xlu0 %50
    %v53 = vmul.f32 %v51, %v47
    %v54 = vsel %vm45, %v53, 0.0
    %v55 = vsel %vm19, %v54, 0.0
    %v56 = vrot.slane %v55, 4
    %v57 = vadd.f32 %v55, %v56
    %v58 = vrot.slane %v57, 2
    %v59 = vadd.f32 %v57, %v58
    %v60 = vrot.slane %v59, 1
    %v61 = vadd.f32 %v59, %v60
    %v62 = vsub.f32 0.0, %v61
    %v63 = vmul.f32 %v62, 1.442695
    %v64 = vpow.pop %v63
    %v65 = vsub.f32 1.0, %v64
    %v66 = vmul.f32 %v65, 0.25
    %v67 = vmul.f32 %v66, %v65
    %v68 = vmul.f32 %v67, %v61
    %p69 = scmp.ne.s32.totalorder 0, 0
    // Predicated region
    $region14: #{tpu_custom_call.1} parent=1 // pred_check
      %p70 = pneg %p69
    $region15: #{tpu_custom_call.1} parent=1 // pred_check_branch
      %72 = sbr.rel (%p70) target = $region17
    $region16: #{tpu_custom_call.1} parent=1 // pred_region
      %vm73 = vcmask 1040384
      %v74 = vsel %vm73, %v68, 0.0
      %75 = vadd.xlane.f32.xlu0 %v74
      %v76 = vpop.xlane.xlu0 %75
      %v77 = vrot.slane %v76, 4
      %v78 = vadd.f32 %v76, %v77
      %v79 = vrot.slane %v78, 2
      %v80 = vadd.f32 %v78, %v79
      %v81 = vrot.slane %v80, 1
      %v82 = vadd.f32 %v80, %v81
      %s83 = vtos %v82
      %v84 = vstv %s83
      %85 = vst [vmem:[#allocation4] sm:$0xff] %v84
    $region17: #{tpu_custom_call.1} parent=1 // pred_fallthru
      _
    %p86 = scmp.eq.s32.totalorder 0, 0
    // Predicated region
    $region18: #{tpu_custom_call.1} parent=1 // pred_check
      %p87 = pneg %p86
    $region19: #{tpu_custom_call.1} parent=1 // pred_check_branch
      %89 = sbr.rel (%p87) target = $region21
    $region20: #{tpu_custom_call.1} parent=1 // pred_region
      %s90 = smul.u32 0, 128
      %v91 = vlaneseq
      %v92 = vand.u32 %v91, 127
      %v93 = vstv %s90
      %v94 = vadd.s32 %v93, %v92
      %s95 = sld [smem:[#allocation3]]
      %v96 = vstv %s95
      %vm97 = vcmp.lt.s32.totalorder %v94, %v96
      %v98 = vsel %vm97, %v68, 0.0
      %vm99 = vcmask 1040384
      %v100 = vsel %vm99, %v98, 0.0
      %101 = vadd.xlane.f32.xlu0 %v100
      %v102 = vpop.xlane.xlu0 %101
      %v103 = vrot.slane %v102, 4
      %v104 = vadd.f32 %v102, %v103
      %v105 = vrot.slane %v104, 2
      %v106 = vadd.f32 %v104, %v105
      %v107 = vrot.slane %v106, 1
      %v108 = vadd.f32 %v106, %v107
      %s109 = vtos %v108
      %v110 = vstv %s109
      %111 = vst [vmem:[#allocation4] sm:$0xff] %v110
    $region21: #{tpu_custom_call.1} parent=1 // pred_fallthru
      _
    // Predicated region
    $region22: #{tpu_custom_call.1} parent=1 // pred_check
      _
    $region23: #{tpu_custom_call.1} parent=1 // pred_check_branch
      %113 = sbr.rel (0) target = $region25
    $region24: #{tpu_custom_call.1} parent=1 // pred_region
      %s115 = ssub.s32 128, 128
      %116 = vsyncadd [#allocation5], %s115
      %s118 = sshll.u32 [#allocation4], 4
      %s119 = int_to_ptr.vmem [resolvable:$true] %s118
      %121 = dma.vmem_to_hbm [thread:$0]  %s119, 128, %s4, [#allocation5]
    $region25: #{tpu_custom_call.1} parent=1 // pred_fallthru
      _
    // Predicated region
    $region26: #{tpu_custom_call.1} parent=1 // pred_check
      _
    $region27: #{tpu_custom_call.1} parent=1 // pred_check_branch
      %123 = sbr.rel (0) target = $region29
    $region28: #{tpu_custom_call.1} parent=1 // pred_region
      %124 = dma.done [#allocation5], 128
    $region29: #{tpu_custom_call.1} parent=1 // pred_fallthru
      _
    %125 = vsyncpa [#allocation5], 1

</llo_original>
